<compile_context>
chip_gen: v6e
topology: v6e:2x2x1
jax: 0.10.0
libtpu: 0.0.40
codegen_flags: <defaults>
</compile_context>

<pallas_src>
import functools
import math

import jax
import jax.numpy as jnp
from jax import lax
from jax.experimental import pallas as pl
from jax.experimental.pallas import tpu as pltpu


# ---------------------------------------------------------------------------
# Fused Pallas kernel: u/v projection + causal attention (all heads) + c_proj
# ---------------------------------------------------------------------------

def _ssa_fused_kernel(x_ref, w_uv_ref, b_uv_ref, w_cp_ref, b_cp_ref, o_ref,
                      *, n_head):
    """One grid step = one batch element; all heads processed in-program.

    Block shapes:
      x_ref    : (1, T, C)   raw input (also supplies the 'keys')
      w_uv_ref : (C, 2C)     [w_u^T * 1/sqrt(C) | w_v^T]   (VMEM-resident)
      b_uv_ref : (1, 2C)
      w_cp_ref : (C, C)      c_proj^T
      b_cp_ref : (1, C)
      o_ref    : (1, T, C)   lane-dense output in the original (B, T, C) layout
    """
    xb = x_ref[0]                                   # (T, C)
    T, C = xb.shape
    hs = C // n_head

    x32 = xb.astype(jnp.float32)

    # Fused u/v projection — one MXU pass over x.  The 1/sqrt(C) attention
    # scale is already folded into the u half of the weights/bias.
    uv = jnp.dot(x32, w_uv_ref[...],
                 preferred_element_type=jnp.float32) + b_uv_ref[...]
    u_all = uv[:, :C]                               # (T, C), pre-scaled
    v_all = uv[:, C:]                               # (T, C)

    # Causal mask shared by all heads.
    row = lax.broadcasted_iota(jnp.int32, (T, T), 0)
    col = lax.broadcasted_iota(jnp.int32, (T, T), 1)
    causal = row >= col

    # TODO(synk): for large T, switch to flash-style KV tiling with online
    # softmax (and causal block skipping) instead of materializing (T, T)
    # scores; for large C, tile the resident weights / feed the MXU in bf16.
    head_outs = []
    for h in range(n_head):                         # static unroll: heads batched per program
        lo = h * hs
        u_h = u_all[:, lo:lo + hs]                  # (T, hs)
        k_h = x32[:, lo:lo + hs]                    # keys = raw x head slice
        v_h = v_all[:, lo:lo + hs]                  # (T, hs)

        # scores = u_h @ k_h^T, contracting feature dims directly
        # (no explicit transpose materialized).
        s = lax.dot_general(
            u_h, k_h,
            dimension_numbers=(((1,), (1,)), ((), ())),
            preferred_element_type=jnp.float32)     # (T, T)
        s = jnp.where(causal, s, -jnp.inf)

        m = jnp.max(s, axis=-1, keepdims=True)
        p = jnp.exp(s - m)
        denom = jnp.sum(p, axis=-1, keepdims=True)
        # approx=True would push this onto the EUP slot for production T;
        # exact reciprocal keeps the 1e-4 verification tolerance here.
        att = p * pl.reciprocal(denom, approx=False)

        head_outs.append(jnp.dot(att, v_h, preferred_element_type=jnp.float32))

    y = jnp.concatenate(head_outs, axis=-1)         # (T, C) — lane-dense

    # Fused output projection (c_proj).
    out = jnp.dot(y, w_cp_ref[...],
                  preferred_element_type=jnp.float32) + b_cp_ref[...]
    o_ref[0] = out.astype(o_ref.dtype)


# ---------------------------------------------------------------------------
# Wrapper
# ---------------------------------------------------------------------------

def prepare_params(params, n_embd):
    """One-time weight prep: transpose to (K, N), fuse w_u/w_v, fold scale."""
    scale = 1.0 / math.sqrt(n_embd)                 # PyTorch code scales by 1/sqrt(C)
    w_uv = jnp.concatenate(
        [params["w_u_w"].T * scale, params["w_v_w"].T], axis=1)       # (C, 2C)
    b_uv = jnp.concatenate(
        [params["w_u_b"] * scale, params["w_v_b"]]).reshape(1, 2 * n_embd)
    return {
        "w_uv": w_uv,
        "b_uv": b_uv,
        "w_cp": params["c_proj_w"].T,                                  # (C, C)
        "b_cp": params["c_proj_b"].reshape(1, n_embd),
    }


def ssa_forward(x, prepped, n_head):
    B, T, C = x.shape
    kern = functools.partial(_ssa_fused_kernel, n_head=n_head)
    return pl.pallas_call(
        kern,
        out_shape=jax.ShapeDtypeStruct((B, T, C), x.dtype),
        grid=(B,),
        in_specs=[
            pl.BlockSpec((1, T, C), lambda b: (b, 0, 0)),       # x (and keys)
            pl.BlockSpec((C, 2 * C), lambda b: (0, 0)),         # fused w_u|w_v (resident)
            pl.BlockSpec((1, 2 * C), lambda b: (0, 0)),
            pl.BlockSpec((C, C), lambda b: (0, 0)),             # c_proj (resident)
            pl.BlockSpec((1, C), lambda b: (0, 0)),
        ],
        out_specs=pl.BlockSpec((1, T, C), lambda b: (b, 0, 0)), # lane-dense (B,T,C)
        compiler_params=pltpu.CompilerParams(
            dimension_semantics=("parallel",)),                 # 2-TC sharding on v7x
    )(x, prepped["w_uv"], prepped["b_uv"], prepped["w_cp"], prepped["b_cp"])


# ---------------------------------------------------------------------------
# Pure-JAX reference (for verification)
# ---------------------------------------------------------------------------

def ssa_reference(x, params, n_head):
    B, T, C = x.shape
    hs = C // n_head
    lin = lambda z, w, b: z @ w.T + b
    u = lin(x, params["w_u_w"], params["w_u_b"]).reshape(B, T, n_head, hs).transpose(0, 2, 1, 3)
    xh = x.reshape(B, T, n_head, hs).transpose(0, 2, 1, 3)
    att = jnp.einsum("bhqd,bhkd->bhqk", u, xh) * (1.0 / math.sqrt(C))
    mask = jnp.tril(jnp.ones((T, T), dtype=bool))
    att = jnp.where(mask[None, None], att, -jnp.inf)
    att = jax.nn.softmax(att, axis=-1)
    v = lin(x, params["w_v_w"], params["w_v_b"]).reshape(B, T, n_head, hs).transpose(0, 2, 1, 3)
    y = jnp.einsum("bhqk,bhkd->bhqd", att, v)
    y = y.transpose(0, 2, 1, 3).reshape(B, T, C)
    return lin(y, params["c_proj_w"], params["c_proj_b"])


# ---------------------------------------------------------------------------
# Parameter init (deterministic, PyTorch-Linear-style uniform)
# ---------------------------------------------------------------------------

def init_params(key, n_embd, n_head):
    hs = n_embd // n_head

    def linear_init(k, out_f, in_f):
        kw, kb = jax.random.split(k)
        bound = 1.0 / math.sqrt(in_f)
        w = jax.random.uniform(kw, (out_f, in_f), jnp.float32, -bound, bound)
        b = jax.random.uniform(kb, (out_f,), jnp.float32, -bound, bound)
        return w, b

    k1, k2, k3, k4 = jax.random.split(key, 4)
    w_u_w, w_u_b = linear_init(k1, n_embd, n_embd)
    w_v_w, w_v_b = linear_init(k2, n_embd, n_embd)
    helper_w, helper_b = linear_init(k3, hs, n_embd)   # unused in forward (spec parity)
    c_proj_w, c_proj_b = linear_init(k4, n_embd, n_embd)
    return {
        "w_u_w": w_u_w, "w_u_b": w_u_b,
        "w_v_w": w_v_w, "w_v_b": w_v_b,
        "helper_w": helper_w, "helper_b": helper_b,
        "c_proj_w": c_proj_w, "c_proj_b": c_proj_b,
    }


# ---------------------------------------------------------------------------
# Main
# ---------------------------------------------------------------------------

if __name__ == "__main__":
    # Small config: block_size=8, n_embd=32, n_head=4 -> hs=8
    B, T, C, N_HEAD = 2, 8, 32, 4

    key = jax.random.PRNGKey(0)
    k_param, k_x = jax.random.split(key)
    params = init_params(k_param, C, N_HEAD)
    x = jax.random.normal(k_x, (B, T, C), jnp.float32)

    prepped = prepare_params(params, C)             # one-time weight fuse/transpose
    out = ssa_forward(x, prepped, N_HEAD)
    out = jax.block_until_ready(out)

    ref = ssa_reference(x, params, N_HEAD)
    assert out.shape == (B, T, C)
    assert jnp.allclose(out, ref, atol=1e-4, rtol=1e-4), "mismatch vs reference"

    print("KERNEL_OK")
</pallas_src>

<mosaic_0001>
module attributes {stable_mosaic.version = 11 : i64} {
  func.func @_ssa_fused_kernel(%arg0: i32, %arg1: memref<1x8x32xf32, #tpu.memory_space<vmem>>, %arg2: memref<32x64xf32, #tpu.memory_space<vmem>>, %arg3: memref<1x64xf32, #tpu.memory_space<vmem>>, %arg4: memref<32x32xf32, #tpu.memory_space<vmem>>, %arg5: memref<1x32xf32, #tpu.memory_space<vmem>>, %arg6: memref<1x8x32xf32, #tpu.memory_space<vmem>>) attributes {dimension_semantics = [#tpu.dimension_semantics<parallel>], iteration_bounds = array<i64: 2>, scalar_prefetch = 0 : i64, scratch_operands = 0 : i64, tpu.core_type = #tpu.core_type<tc>, window_params = [{transform_indices = @transform_0, window_bounds = array<i64: 1, 8, 32>}, {pipeline_mode = #tpu.pipeline_mode<synchronous>, transform_indices = @transform_1, window_bounds = array<i64: 32, 64>}, {pipeline_mode = #tpu.pipeline_mode<synchronous>, transform_indices = @transform_2, window_bounds = array<i64: 1, 64>}, {pipeline_mode = #tpu.pipeline_mode<synchronous>, transform_indices = @transform_3, window_bounds = array<i64: 32, 32>}, {pipeline_mode = #tpu.pipeline_mode<synchronous>, transform_indices = @transform_4, window_bounds = array<i64: 1, 32>}, {transform_indices = @transform_5, window_bounds = array<i64: 1, 8, 32>}]} {
    %c0 = arith.constant 0 : index
    %c0_0 = arith.constant 0 : index
    %c0_1 = arith.constant 0 : index
    %0 = vector.load %arg1[%c0, %c0_0, %c0_1] : memref<1x8x32xf32, #tpu.memory_space<vmem>>, vector<1x8x32xf32>
    %1 = vector.shape_cast %0 : vector<1x8x32xf32> to vector<8x32xf32>
    %c0_2 = arith.constant 0 : index
    %c0_3 = arith.constant 0 : index
    %2 = vector.load %arg2[%c0_2, %c0_3] : memref<32x64xf32, #tpu.memory_space<vmem>>, vector<32x64xf32>
    %cst = arith.constant dense<0.000000e+00> : vector<8x64xf32>
    %3 = tpu.matmul %1, %2, %cst {dimension_numbers = #tpu.dot_dimension_numbers<[1], [0], [0], [1], [0, 0, 1, 1], [], []>} : vector<8x32xf32>, vector<32x64xf32>, vector<8x64xf32> -> vector<8x64xf32>
    %c0_4 = arith.constant 0 : index
    %c0_5 = arith.constant 0 : index
    %4 = vector.load %arg3[%c0_4, %c0_5] : memref<1x64xf32, #tpu.memory_space<vmem>>, vector<1x64xf32>
    %5 = vector.broadcast %4 : vector<1x64xf32> to vector<8x64xf32>
    %6 = arith.addf %3, %5 : vector<8x64xf32>
    %7 = vector.extract_strided_slice %6 {offsets = [0, 0], sizes = [8, 32], strides = [1, 1]} : vector<8x64xf32> to vector<8x32xf32>
    %8 = vector.extract_strided_slice %6 {offsets = [0, 32], sizes = [8, 32], strides = [1, 1]} : vector<8x64xf32> to vector<8x32xf32>
    %9 = tpu.iota {dimensions = array<i32: 0>} : vector<8x8xi32>
    %10 = tpu.iota {dimensions = array<i32: 1>} : vector<8x8xi32>
    %11 = arith.cmpi sge, %9, %10 : vector<8x8xi32>
    %12 = vector.extract_strided_slice %7 {offsets = [0, 0], sizes = [8, 8], strides = [1, 1]} : vector<8x32xf32> to vector<8x8xf32>
    %13 = vector.extract_strided_slice %1 {offsets = [0, 0], sizes = [8, 8], strides = [1, 1]} : vector<8x32xf32> to vector<8x8xf32>
    %14 = vector.extract_strided_slice %8 {offsets = [0, 0], sizes = [8, 8], strides = [1, 1]} : vector<8x32xf32> to vector<8x8xf32>
    %cst_6 = arith.constant dense<0.000000e+00> : vector<8x8xf32>
    %15 = tpu.matmul %12, %13, %cst_6 {dimension_numbers = #tpu.dot_dimension_numbers<[1], [1], [0], [0], [0, 0, 1, 0], [], []>} : vector<8x8xf32>, vector<8x8xf32>, vector<8x8xf32> -> vector<8x8xf32>
    %cst_7 = arith.constant 0xFF800000 : f32
    %16 = vector.broadcast %cst_7 : f32 to vector<8x8xf32>
    %17 = arith.select %11, %15, %16 : vector<8x8xi1>, vector<8x8xf32>
    %cst_8 = arith.constant dense<0xFF800000> : vector<8xf32>
    %18 = vector.multi_reduction <maximumf>, %17, %cst_8 [1] : vector<8x8xf32> to vector<8xf32>
    %19 = vector.shape_cast %18 : vector<8xf32> to vector<8x1xf32>
    %20 = vector.broadcast %19 : vector<8x1xf32> to vector<8x8xf32>
    %21 = arith.subf %17, %20 : vector<8x8xf32>
    %22 = math.exp %21 : vector<8x8xf32>
    %cst_9 = arith.constant dense<0.000000e+00> : vector<8xf32>
    %23 = vector.multi_reduction <add>, %22, %cst_9 [1] : vector<8x8xf32> to vector<8xf32>
    %24 = vector.shape_cast %23 : vector<8xf32> to vector<8x1xf32>
    %25 = tpu.reciprocal %24 : vector<8x1xf32> -> vector<8x1xf32>
    %26 = vector.broadcast %25 : vector<8x1xf32> to vector<8x8xf32>
    %27 = arith.mulf %22, %26 : vector<8x8xf32>
    %cst_10 = arith.constant dense<0.000000e+00> : vector<8x8xf32>
    %28 = tpu.matmul %27, %14, %cst_10 {dimension_numbers = #tpu.dot_dimension_numbers<[1], [0], [0], [1], [0, 0, 1, 1], [], []>} : vector<8x8xf32>, vector<8x8xf32>, vector<8x8xf32> -> vector<8x8xf32>
    %29 = vector.extract_strided_slice %7 {offsets = [0, 8], sizes = [8, 8], strides = [1, 1]} : vector<8x32xf32> to vector<8x8xf32>
    %30 = vector.extract_strided_slice %1 {offsets = [0, 8], sizes = [8, 8], strides = [1, 1]} : vector<8x32xf32> to vector<8x8xf32>
    %31 = vector.extract_strided_slice %8 {offsets = [0, 8], sizes = [8, 8], strides = [1, 1]} : vector<8x32xf32> to vector<8x8xf32>
    %cst_11 = arith.constant dense<0.000000e+00> : vector<8x8xf32>
    %32 = tpu.matmul %29, %30, %cst_11 {dimension_numbers = #tpu.dot_dimension_numbers<[1], [1], [0], [0], [0, 0, 1, 0], [], []>} : vector<8x8xf32>, vector<8x8xf32>, vector<8x8xf32> -> vector<8x8xf32>
    %cst_12 = arith.constant 0xFF800000 : f32
    %33 = vector.broadcast %cst_12 : f32 to vector<8x8xf32>
    %34 = arith.select %11, %32, %33 : vector<8x8xi1>, vector<8x8xf32>
    %cst_13 = arith.constant dense<0xFF800000> : vector<8xf32>
    %35 = vector.multi_reduction <maximumf>, %34, %cst_13 [1] : vector<8x8xf32> to vector<8xf32>
    %36 = vector.shape_cast %35 : vector<8xf32> to vector<8x1xf32>
    %37 = vector.broadcast %36 : vector<8x1xf32> to vector<8x8xf32>
    %38 = arith.subf %34, %37 : vector<8x8xf32>
    %39 = math.exp %38 : vector<8x8xf32>
    %cst_14 = arith.constant dense<0.000000e+00> : vector<8xf32>
    %40 = vector.multi_reduction <add>, %39, %cst_14 [1] : vector<8x8xf32> to vector<8xf32>
    %41 = vector.shape_cast %40 : vector<8xf32> to vector<8x1xf32>
    %42 = tpu.reciprocal %41 : vector<8x1xf32> -> vector<8x1xf32>
    %43 = vector.broadcast %42 : vector<8x1xf32> to vector<8x8xf32>
    %44 = arith.mulf %39, %43 : vector<8x8xf32>
    %cst_15 = arith.constant dense<0.000000e+00> : vector<8x8xf32>
    %45 = tpu.matmul %44, %31, %cst_15 {dimension_numbers = #tpu.dot_dimension_numbers<[1], [0], [0], [1], [0, 0, 1, 1], [], []>} : vector<8x8xf32>, vector<8x8xf32>, vector<8x8xf32> -> vector<8x8xf32>
    %46 = vector.extract_strided_slice %7 {offsets = [0, 16], sizes = [8, 8], strides = [1, 1]} : vector<8x32xf32> to vector<8x8xf32>
    %47 = vector.extract_strided_slice %1 {offsets = [0, 16], sizes = [8, 8], strides = [1, 1]} : vector<8x32xf32> to vector<8x8xf32>
    %48 = vector.extract_strided_slice %8 {offsets = [0, 16], sizes = [8, 8], strides = [1, 1]} : vector<8x32xf32> to vector<8x8xf32>
    %cst_16 = arith.constant dense<0.000000e+00> : vector<8x8xf32>
    %49 = tpu.matmul %46, %47, %cst_16 {dimension_numbers = #tpu.dot_dimension_numbers<[1], [1], [0], [0], [0, 0, 1, 0], [], []>} : vector<8x8xf32>, vector<8x8xf32>, vector<8x8xf32> -> vector<8x8xf32>
    %cst_17 = arith.constant 0xFF800000 : f32
    %50 = vector.broadcast %cst_17 : f32 to vector<8x8xf32>
    %51 = arith.select %11, %49, %50 : vector<8x8xi1>, vector<8x8xf32>
    %cst_18 = arith.constant dense<0xFF800000> : vector<8xf32>
    %52 = vector.multi_reduction <maximumf>, %51, %cst_18 [1] : vector<8x8xf32> to vector<8xf32>
    %53 = vector.shape_cast %52 : vector<8xf32> to vector<8x1xf32>
    %54 = vector.broadcast %53 : vector<8x1xf32> to vector<8x8xf32>
    %55 = arith.subf %51, %54 : vector<8x8xf32>
    %56 = math.exp %55 : vector<8x8xf32>
    %cst_19 = arith.constant dense<0.000000e+00> : vector<8xf32>
    %57 = vector.multi_reduction <add>, %56, %cst_19 [1] : vector<8x8xf32> to vector<8xf32>
    %58 = vector.shape_cast %57 : vector<8xf32> to vector<8x1xf32>
    %59 = tpu.reciprocal %58 : vector<8x1xf32> -> vector<8x1xf32>
    %60 = vector.broadcast %59 : vector<8x1xf32> to vector<8x8xf32>
    %61 = arith.mulf %56, %60 : vector<8x8xf32>
    %cst_20 = arith.constant dense<0.000000e+00> : vector<8x8xf32>
    %62 = tpu.matmul %61, %48, %cst_20 {dimension_numbers = #tpu.dot_dimension_numbers<[1], [0], [0], [1], [0, 0, 1, 1], [], []>} : vector<8x8xf32>, vector<8x8xf32>, vector<8x8xf32> -> vector<8x8xf32>
    %63 = vector.extract_strided_slice %7 {offsets = [0, 24], sizes = [8, 8], strides = [1, 1]} : vector<8x32xf32> to vector<8x8xf32>
    %64 = vector.extract_strided_slice %1 {offsets = [0, 24], sizes = [8, 8], strides = [1, 1]} : vector<8x32xf32> to vector<8x8xf32>
    %65 = vector.extract_strided_slice %8 {offsets = [0, 24], sizes = [8, 8], strides = [1, 1]} : vector<8x32xf32> to vector<8x8xf32>
    %cst_21 = arith.constant dense<0.000000e+00> : vector<8x8xf32>
    %66 = tpu.matmul %63, %64, %cst_21 {dimension_numbers = #tpu.dot_dimension_numbers<[1], [1], [0], [0], [0, 0, 1, 0], [], []>} : vector<8x8xf32>, vector<8x8xf32>, vector<8x8xf32> -> vector<8x8xf32>
    %cst_22 = arith.constant 0xFF800000 : f32
    %67 = vector.broadcast %cst_22 : f32 to vector<8x8xf32>
    %68 = arith.select %11, %66, %67 : vector<8x8xi1>, vector<8x8xf32>
    %cst_23 = arith.constant dense<0xFF800000> : vector<8xf32>
    %69 = vector.multi_reduction <maximumf>, %68, %cst_23 [1] : vector<8x8xf32> to vector<8xf32>
    %70 = vector.shape_cast %69 : vector<8xf32> to vector<8x1xf32>
    %71 = vector.broadcast %70 : vector<8x1xf32> to vector<8x8xf32>
    %72 = arith.subf %68, %71 : vector<8x8xf32>
    %73 = math.exp %72 : vector<8x8xf32>
    %cst_24 = arith.constant dense<0.000000e+00> : vector<8xf32>
    %74 = vector.multi_reduction <add>, %73, %cst_24 [1] : vector<8x8xf32> to vector<8xf32>
    %75 = vector.shape_cast %74 : vector<8xf32> to vector<8x1xf32>
    %76 = tpu.reciprocal %75 : vector<8x1xf32> -> vector<8x1xf32>
    %77 = vector.broadcast %76 : vector<8x1xf32> to vector<8x8xf32>
    %78 = arith.mulf %73, %77 : vector<8x8xf32>
    %cst_25 = arith.constant dense<0.000000e+00> : vector<8x8xf32>
    %79 = tpu.matmul %78, %65, %cst_25 {dimension_numbers = #tpu.dot_dimension_numbers<[1], [0], [0], [1], [0, 0, 1, 1], [], []>} : vector<8x8xf32>, vector<8x8xf32>, vector<8x8xf32> -> vector<8x8xf32>
    %80 = tpu.concatenate %28, %45, %62, %79 in 1 : vector<8x8xf32>, vector<8x8xf32>, vector<8x8xf32>, vector<8x8xf32> -> vector<8x32xf32>
    %c0_26 = arith.constant 0 : index
    %c0_27 = arith.constant 0 : index
    %81 = vector.load %arg4[%c0_26, %c0_27] : memref<32x32xf32, #tpu.memory_space<vmem>>, vector<32x32xf32>
    %cst_28 = arith.constant dense<0.000000e+00> : vector<8x32xf32>
    %82 = tpu.matmul %80, %81, %cst_28 {dimension_numbers = #tpu.dot_dimension_numbers<[1], [0], [0], [1], [0, 0, 1, 1], [], []>} : vector<8x32xf32>, vector<32x32xf32>, vector<8x32xf32> -> vector<8x32xf32>
    %c0_29 = arith.constant 0 : index
    %c0_30 = arith.constant 0 : index
    %83 = vector.load %arg5[%c0_29, %c0_30] : memref<1x32xf32, #tpu.memory_space<vmem>>, vector<1x32xf32>
    %84 = vector.broadcast %83 : vector<1x32xf32> to vector<8x32xf32>
    %85 = arith.addf %82, %84 : vector<8x32xf32>
    %c0_31 = arith.constant 0 : index
    %c0_32 = arith.constant 0 : index
    %c0_33 = arith.constant 0 : index
    %86 = vector.load %arg6[%c0_31, %c0_32, %c0_33] : memref<1x8x32xf32, #tpu.memory_space<vmem>>, vector<1x8x32xf32>
    %87 = vector.shape_cast %86 : vector<1x8x32xf32> to vector<8x32xf32>
    %88 = vector.shape_cast %85 : vector<8x32xf32> to vector<1x8x32xf32>
    tpu.vector_store %arg6[%c0_31, %c0_32, %c0_33], %88 {strides = array<i32>} : memref<1x8x32xf32, #tpu.memory_space<vmem>>, vector<1x8x32xf32>,
    return
  }
  func.func @transform_0(%arg0: i32) -> (i32, i32, i32) {
    %c0_i32 = arith.constant 0 : i32
    %c0_i32_0 = arith.constant 0 : i32
    %c0_i32_1 = arith.constant 0 : i32
    return %arg0, %c0_i32, %c0_i32_0 : i32, i32, i32
  }
  func.func @transform_1(%arg0: i32) -> (i32, i32) {
    %c0_i32 = arith.constant 0 : i32
    %c0_i32_0 = arith.constant 0 : i32
    %c0_i32_1 = arith.constant 0 : i32
    return %c0_i32, %c0_i32_0 : i32, i32
  }
  func.func @transform_2(%arg0: i32) -> (i32, i32) {
    %c0_i32 = arith.constant 0 : i32
    %c0_i32_0 = arith.constant 0 : i32
    %c0_i32_1 = arith.constant 0 : i32
    return %c0_i32, %c0_i32_0 : i32, i32
  }
  func.func @transform_3(%arg0: i32) -> (i32, i32) {
    %c0_i32 = arith.constant 0 : i32
    %c0_i32_0 = arith.constant 0 : i32
    %c0_i32_1 = arith.constant 0 : i32
    return %c0_i32, %c0_i32_0 : i32, i32
  }
  func.func @transform_4(%arg0: i32) -> (i32, i32) {
    %c0_i32 = arith.constant 0 : i32
    %c0_i32_0 = arith.constant 0 : i32
    %c0_i32_1 = arith.constant 0 : i32
    return %c0_i32, %c0_i32_0 : i32, i32
  }
  func.func @transform_5(%arg0: i32) -> (i32, i32, i32) {
    %c0_i32 = arith.constant 0 : i32
    %c0_i32_0 = arith.constant 0 : i32
    %c0_i32_1 = arith.constant 0 : i32
    return %arg0, %c0_i32, %c0_i32_0 : i32, i32, i32
  }
}

</mosaic_0001>

<llo_original>
// kernel: tpu_custom_call.1
$region0: #{tpu_custom_call.1}
  #allocation0 [shape = 'u32[]', space=smem, size = 0x4, offset = 0x4, fixed_abs, tag = 'smem constant byte address 0x4 - core index']
  #allocation1 [shape = 'u32[144,128]{1,0:T(1,128)}', space=vmem, size = 0x12000, scoped, tag = 'internal scratch']
  %s0 = inlined_call_operand.hbm [shape: f32[2,8,32], index: 0, kind: input, shape index: {}]
  %s1 = inlined_call_operand.hbm [shape: f32[32,64], index: 1, kind: input, shape index: {}]
  %s2 = inlined_call_operand.vmem [shape: f32[1,64], index: 2, kind: input, shape index: {}]
  %s3 = inlined_call_operand.hbm [shape: f32[32,32], index: 3, kind: input, shape index: {}]
  %s4 = inlined_call_operand.vmem [shape: f32[1,32], index: 4, kind: input, shape index: {}]
  %s5 = inlined_call_operand.hbm [shape: f32[2,8,32], index: 5, kind: output, shape index: {}]
  %s6 = sld [smem:[#allocation0]]
  $region65: #{tpu_custom_call.1} parent=0
    _
  %s8 = ssub.s32 1, %s6
  %s9 = scalar_select 0, %s8, %s6
  $region1: #{tpu_custom_call.1} parent=0
    #allocation2 [shape = 'u8[8192]{0}', space=vmem, size = 0x2000, scoped, tag = 'input window, operand 0']
    #allocation3 [shape = 's32[2]{0}', space=sflag, size = 0x8, scoped, tag = 'scoped memory for tpu_custom_call.1']
    #allocation4 [shape = 's32[2]{0}', space=sflag, size = 0x8, scoped, tag = 'scoped memory for tpu_custom_call.1']
    #allocation5 [shape = 'u8[16384]{0}', space=vmem, size = 0x4000, scoped, tag = 'input window, operand 1, single buffered']
    #allocation6 [shape = 's32[1]{0}', space=sflag, size = 0x4, scoped, tag = 'scoped memory for tpu_custom_call.1']
    #allocation7 [shape = 'u8[16384]{0}', space=vmem, size = 0x4000, scoped, tag = 'input window, operand 3, single buffered']
    #allocation8 [shape = 'u8[8192]{0}', space=vmem, size = 0x2000, scoped, tag = 'output window, operand 0']
    %10 = vsyncpa [#allocation3], 0
    %s11 = scalar_lea.sflag [#allocation3], 1
    %12 = vsyncpa %s11, 0
    %13 = vsyncpa [#allocation6], 0
    %14 = vsyncpa [#allocation4], 0
    %s15 = scalar_lea.sflag [#allocation4], 1
    %16 = vsyncpa %s15, 0
    loop: start=0, step=1, limit=4
    $region2: #{tpu_custom_call.1} parent=1 // loop_pre_header
      _
    $region3: #{tpu_custom_call.1} parent=1 // loop_header
      %s18 = sphi 0, %s22
      %p19 = scmp.ge.s32.totalorder %s18, 4
      %s28 = sphi 0, %s30
      %s31 = sphi 0, %s28
      %s32 = sphi 0, %s31
      %s48 = sphi 0, %s32
      %s52 = sphi 0, %s52
      %s54 = sphi 0, %s52
      %s55 = sphi 0, %s54
      %s69 = sphi 0, %s55
      %s73 = sphi 0, %s73
      %s75 = sphi 0, %s73
      %s76 = sphi 0, %s75
      %s90 = sphi 0, %s76
      %s94 = sphi 0, %s94
      %s96 = sphi 0, %s94
      %s97 = sphi 0, %s96
      %s111 = sphi 0, %s97
      %s115 = sphi 0, %s115
      %s117 = sphi 0, %s115
      %s118 = sphi 0, %s117
      %s132 = sphi 0, %s118
      %s138 = sphi 0, %s140
      %s141 = sphi 0, %s138
      %s142 = sphi 0, %s141
      %s158 = sphi 0, %s142
    $region4: #{tpu_custom_call.1} parent=1 // loop_header_branch
      %21 = sbr.rel (%p19) target = $region8
    $region5: #{tpu_custom_call.1} parent=1 // loop_body
      %s23 = ssub.s32 %s18, 1
      %s24 = ssub.s32 %s18, 2
      %s25 = sadd.s32 %s18, 1
      %s26 = ssub.s32 %s18, %s25
      %p27 = scmp.eq.s32.totalorder %s26, 0
      %s29 = sadd.s32 %s28, 1
      %s30 = scalar_select %p27, %s28, %s29
      %p33 = pneg %p27
      %p34 = scmp.eq.s32.totalorder %s18, 1
      %p35 = por %p33, %p34
      %p36 = scmp.ne.s32.totalorder %s28, %s31
      %p37 = scmp.eq.s32.totalorder %s18, 0
      %p38 = por %p36, %p37
      %p39 = scmp.ne.s32.totalorder %s28, %s31
      %p40 = scmp.eq.s32.totalorder %s23, 1
      %p41 = por %p39, %p40
      %p42 = scmp.ne.s32.totalorder %s31, %s32
      %p43 = scmp.eq.s32.totalorder %s23, 0
      %p44 = por %p42, %p43
      %p45 = scmp.ne.s32.totalorder %s31, %s32
      %p46 = scmp.eq.s32.totalorder %s24, 1
      %p47 = por %p45, %p46
      %p49 = scmp.ne.s32.totalorder %s32, %s48
      %p50 = scmp.eq.s32.totalorder %s24, 0
      %p51 = por %p49, %p50
      %s53 = sadd.s32 %s52, 1
      %p56 = scmp.eq.s32.totalorder %s18, 1
      %p57 = scmp.ne.s32.totalorder %s52, %s54
      %p58 = scmp.eq.s32.totalorder %s18, 0
      %p59 = por %p57, %p58
      %p60 = scmp.ne.s32.totalorder %s52, %s54
      %p61 = scmp.eq.s32.totalorder %s23, 1
      %p62 = por %p60, %p61
      %p63 = scmp.ne.s32.totalorder %s54, %s55
      %p64 = scmp.eq.s32.totalorder %s23, 0
      %p65 = por %p63, %p64
      %p66 = scmp.ne.s32.totalorder %s54, %s55
      %p67 = scmp.eq.s32.totalorder %s24, 1
      %p68 = por %p66, %p67
      %p70 = scmp.ne.s32.totalorder %s55, %s69
      %p71 = scmp.eq.s32.totalorder %s24, 0
      %p72 = por %p70, %p71
      %s74 = sadd.s32 %s73, 1
      %p77 = scmp.eq.s32.totalorder %s18, 1
      %p78 = scmp.ne.s32.totalorder %s73, %s75
      %p79 = scmp.eq.s32.totalorder %s18, 0
      %p80 = por %p78, %p79
      %p81 = scmp.ne.s32.totalorder %s73, %s75
      %p82 = scmp.eq.s32.totalorder %s23, 1
      %p83 = por %p81, %p82
      %p84 = scmp.ne.s32.totalorder %s75, %s76
      %p85 = scmp.eq.s32.totalorder %s23, 0
      %p86 = por %p84, %p85
      %p87 = scmp.ne.s32.totalorder %s75, %s76
      %p88 = scmp.eq.s32.totalorder %s24, 1
      %p89 = por %p87, %p88
      %p91 = scmp.ne.s32.totalorder %s76, %s90
      %p92 = scmp.eq.s32.totalorder %s24, 0
      %p93 = por %p91, %p92
      %s95 = sadd.s32 %s94, 1
      %p98 = scmp.eq.s32.totalorder %s18, 1
      %p99 = scmp.ne.s32.totalorder %s94, %s96
      %p100 = scmp.eq.s32.totalorder %s18, 0
      %p101 = por %p99, %p100
      %p102 = scmp.ne.s32.totalorder %s94, %s96
      %p103 = scmp.eq.s32.totalorder %s23, 1
      %p104 = por %p102, %p103
      %p105 = scmp.ne.s32.totalorder %s96, %s97
      %p106 = scmp.eq.s32.totalorder %s23, 0
      %p107 = por %p105, %p106
      %p108 = scmp.ne.s32.totalorder %s96, %s97
      %p109 = scmp.eq.s32.totalorder %s24, 1
      %p110 = por %p108, %p109
      %p112 = scmp.ne.s32.totalorder %s97, %s111
      %p113 = scmp.eq.s32.totalorder %s24, 0
      %p114 = por %p112, %p113
      %s116 = sadd.s32 %s115, 1
      %p119 = scmp.eq.s32.totalorder %s18, 1
      %p120 = scmp.ne.s32.totalorder %s115, %s117
      %p121 = scmp.eq.s32.totalorder %s18, 0
      %p122 = por %p120, %p121
      %p123 = scmp.ne.s32.totalorder %s115, %s117
      %p124 = scmp.eq.s32.totalorder %s23, 1
      %p125 = por %p123, %p124
      %p126 = scmp.ne.s32.totalorder %s117, %s118
      %p127 = scmp.eq.s32.totalorder %s23, 0
      %p128 = por %p126, %p127
      %p129 = scmp.ne.s32.totalorder %s117, %s118
      %p130 = scmp.eq.s32.totalorder %s24, 1
      %p131 = por %p129, %p130
      %p133 = scmp.ne.s32.totalorder %s118, %s132
      %p134 = scmp.eq.s32.totalorder %s24, 0
      %p135 = por %p133, %p134
      %s136 = ssub.s32 %s18, %s25
      %p137 = scmp.eq.s32.totalorder %s136, 0
      %s139 = sadd.s32 %s138, 1
      %s140 = scalar_select %p137, %s138, %s139
      %p143 = pneg %p137
      %p144 = scmp.eq.s32.totalorder %s18, 1
      %p145 = por %p143, %p144
      %p146 = scmp.ne.s32.totalorder %s138, %s141
      %p147 = scmp.eq.s32.totalorder %s18, 0
      %p148 = por %p146, %p147
      %p149 = scmp.ne.s32.totalorder %s138, %s141
      %p150 = scmp.eq.s32.totalorder %s23, 1
      %p151 = por %p149, %p150
      %p152 = scmp.ne.s32.totalorder %s141, %s142
      %p153 = scmp.eq.s32.totalorder %s23, 0
      %p154 = por %p152, %p153
      %p155 = scmp.ne.s32.totalorder %s141, %s142
      %p156 = scmp.eq.s32.totalorder %s24, 1
      %p157 = por %p155, %p156
      %p159 = scmp.ne.s32.totalorder %s142, %s158
      %p160 = scmp.eq.s32.totalorder %s24, 0
      %p161 = por %p159, %p160
      %p162 = scmp.le.s32.totalorder 1, %s18
      %p163 = scmp.lt.s32.totalorder %s18, 3
      %p164 = pnand %p162, %p163
      %p165 = pneg %p164
      // Predicated region
      $region9: #{tpu_custom_call.1} parent=5 // pred_check
        _
      $region10: #{tpu_custom_call.1} parent=5 // pred_check_branch
        %167 = sbr.rel (%p164) target = $region12
      $region11: #{tpu_custom_call.1} parent=5 // pred_region
        %s168 = ssub.s32 %s18, 1
        // Predicated region
        $region13: #{tpu_custom_call.1} parent=11 // pred_check
          %p169 = pneg %p65
        $region14: #{tpu_custom_call.1} parent=11 // pred_check_branch
          %171 = sbr.rel (%p169) target = $region16
        $region15: #{tpu_custom_call.1} parent=11 // pred_region
          %s173 = ssub.s32 512, 512
          %174 = vsyncadd [#allocation6], %s173
          %s175 = sshll.u32 [#allocation5], 4
          %s176 = int_to_ptr.vmem [resolvable:$true] %s175
          %181 = dma.hbm_to_vmem [thread:$0]  %s1, 512, %s176, [#allocation6], 128, 128, 8
        $region16: #{tpu_custom_call.1} parent=11 // pred_fallthru
          _
        // Predicated region
        $region17: #{tpu_custom_call.1} parent=11 // pred_check
          %p182 = pneg %p86
        $region18: #{tpu_custom_call.1} parent=11 // pred_check_branch
          %184 = sbr.rel (%p182) target = $region20
        $region19: #{tpu_custom_call.1} parent=11 // pred_region
          _
        $region20: #{tpu_custom_call.1} parent=11 // pred_fallthru
          _
        // Predicated region
        $region21: #{tpu_custom_call.1} parent=11 // pred_check
          %p185 = pneg %p107
        $region22: #{tpu_custom_call.1} parent=11 // pred_check_branch
          %187 = sbr.rel (%p185) target = $region24
        $region23: #{tpu_custom_call.1} parent=11 // pred_region
          %s189 = ssub.s32 512, 512
          %190 = vsyncadd [#allocation6], %s189
          %s191 = sshll.u32 [#allocation7], 4
          %s192 = int_to_ptr.vmem [resolvable:$true] %s191
          %197 = dma.hbm_to_vmem [thread:$0]  %s3, 512, %s192, [#allocation6], 128, 128, 8
        $region24: #{tpu_custom_call.1} parent=11 // pred_fallthru
          _
        // Predicated region
        $region25: #{tpu_custom_call.1} parent=11 // pred_check
          %p198 = pneg %p128
        $region26: #{tpu_custom_call.1} parent=11 // pred_check_branch
          %200 = sbr.rel (%p198) target = $region28
        $region27: #{tpu_custom_call.1} parent=11 // pred_region
          _
        $region28: #{tpu_custom_call.1} parent=11 // pred_fallthru
          _
      $region12: #{tpu_custom_call.1} parent=5 // pred_fallthru
        _
      %p201 = scmp.lt.s32.totalorder %s18, 2
      // Predicated region
      $region29: #{tpu_custom_call.1} parent=5 // pred_check
        %p202 = pneg %p201
      $region30: #{tpu_custom_call.1} parent=5 // pred_check_branch
        %204 = sbr.rel (%p202) target = $region32
      $region31: #{tpu_custom_call.1} parent=5 // pred_region
        // Predicated region
        $region33: #{tpu_custom_call.1} parent=31 // pred_check
          %p205 = pneg %p38
        $region34: #{tpu_custom_call.1} parent=31 // pred_check_branch
          %207 = sbr.rel (%p205) target = $region36
        $region35: #{tpu_custom_call.1} parent=31 // pred_region
          %s208 = sand.u32 %s28, 1
          %s209 = scalar_lea.sflag [#allocation3], %s208
          %s210 = sand.u32 %s28, 1
          %s211 = smul.addr %s210, 8
          %s212 = scalar_lea.vmem [#allocation2], %s211
          %s214 = ssub.s32 128, 128
          %215 = vsyncadd %s209, %s214
          %s216 = smul.addr %s18, 128
          %s217 = scalar_lea.hbm %s0, %s216
          %s219 = sshll.u32 %s212, 4
          %s220 = int_to_ptr.vmem [resolvable:$true] %s219
          %222 = dma.hbm_to_vmem [thread:$0]  %s217, 128, %s220, %s209
        $region36: #{tpu_custom_call.1} parent=31 // pred_fallthru
          _
      $region32: #{tpu_custom_call.1} parent=5 // pred_fallthru
        _
      %p223 = scmp.le.s32.totalorder 1, %s18
      %p224 = scmp.lt.s32.totalorder %s18, 3
      %p225 = pnand %p223, %p224
      %p226 = pneg %p225
      // Predicated region
      $region37: #{tpu_custom_call.1} parent=5 // pred_check
        _
      $region38: #{tpu_custom_call.1} parent=5 // pred_check_branch
        %228 = sbr.rel (%p225) target = $region40
      $region39: #{tpu_custom_call.1} parent=5 // pred_region
        %s229 = ssub.s32 %s18, 1
        %s230 = sand.u32 %s31, 1
        %s231 = scalar_lea.sflag [#allocation3], %s230
        %s232 = sand.u32 %s31, 1
        %s233 = smul.addr %s232, 8
        %s234 = scalar_lea.vmem [#allocation2], %s233
        // Predicated region
        $region41: #{tpu_custom_call.1} parent=39 // pred_check
          %p235 = pneg %p44
        $region42: #{tpu_custom_call.1} parent=39 // pred_check_branch
          %237 = sbr.rel (%p235) target = $region44
        $region43: #{tpu_custom_call.1} parent=39 // pred_region
          %238 = dma.done %s231, 128
        $region44: #{tpu_custom_call.1} parent=39 // pred_fallthru
          _
        // Predicated region
        $region45: #{tpu_custom_call.1} parent=39 // pred_check
          %p239 = pneg %p65
        $region46: #{tpu_custom_call.1} parent=39 // pred_check_branch
          %241 = sbr.rel (%p239) target = $region48
        $region47: #{tpu_custom_call.1} parent=39 // pred_region
          %242 = dma.done [#allocation6], 512
        $region48: #{tpu_custom_call.1} parent=39 // pred_fallthru
          _
        // Predicated region
        $region49: #{tpu_custom_call.1} parent=39 // pred_check
          %p243 = pneg %p107
        $region50: #{tpu_custom_call.1} parent=39 // pred_check_branch
          %245 = sbr.rel (%p243) target = $region52
        $region51: #{tpu_custom_call.1} parent=39 // pred_region
          %246 = dma.done [#allocation6], 512
        $region52: #{tpu_custom_call.1} parent=39 // pred_fallthru
          _
        %s247 = sand.u32 %s31, 1
        %s248 = scalar_lea.sflag [#allocation3], %s247
        %s249 = sand.u32 %s31, 1
        %s250 = smul.addr %s249, 8
        %s251 = scalar_lea.vmem [#allocation2], %s250
        %p252 = pneg %p44
        %p253 = pneg %p41
        %p254 = pneg %p65
        %p255 = pneg %p62
        %p256 = pneg %p86
        %p257 = pneg %p83
        %p258 = pneg %p107
        %p259 = pneg %p104
        %p260 = pneg %p128
        %p261 = pneg %p125
        %p262 = pneg %p154
        %p263 = pneg %p151
        %s264 = sand.u32 %s141, 1
        %s265 = scalar_lea.sflag [#allocation4], %s264
        %s266 = sand.u32 %s141, 1
        %s267 = smul.addr %s266, 8
        %s268 = scalar_lea.vmem [#allocation8], %s267
        %v269 = vld [vmem:[%s234] sm:$0xff]
        %v270 = vld [vmem:[#allocation5] sm:$0xff]
        %v271 = vld [vmem:[#allocation5 + $0x8] sm:$0xff]
        %v272 = vld [vmem:[#allocation5 + $0x10] sm:$0xff]
        %v273 = vld [vmem:[#allocation5 + $0x18] sm:$0xff]
        %v274 = vld [vmem:[%s2] sm:$0x1]
        %v276 = vlaneseq
        %v277 = vshrl.u32 %v276, 7
        %v278 = vsub.s32 0, %v277
        %v279 = vrot.slane %v274, %v278
        %vm281 = vcmask 261120
        %v283 = vsel %vm281, %v269, 0
        %285 = vmatprep.subr.mxu0 0.0
        %286 = vmatpush1.msra.mxu0 0.0
        %287 = vmatprep.subr.mxu0 0.0
        %288 = vmatpush1.msra.mxu0 0.0
        %289 = vmatprep.subr.mxu0 0.0
        %290 = vmatpush1.msra.mxu0 0.0
        %291 = vmatprep.subr.mxu0 0.0
        %292 = vmatpush1.msra.mxu0 0.0
        %293 = vmatprep.subr.mxu0 0.0
        %294 = vmatpush1.msra.mxu0 0.0
        %295 = vmatprep.subr.mxu0 0.0
        %296 = vmatpush1.msra.mxu0 0.0
        %297 = vmatprep.subr.mxu0 0.0
        %298 = vmatpush1.msra.mxu0 0.0
        %299 = vmatprep.subr.mxu0 0.0
        %300 = vmatpush1.msra.mxu0 0.0
        %301 = vmatprep.subr.mxu0 0.0
        %302 = vmatpush1.msra.mxu0 0.0
        %303 = vmatprep.subr.mxu0 0.0
        %304 = vmatpush1.msra.mxu0 0.0
        %305 = vmatprep.subr.mxu0 0.0
        %306 = vmatpush1.msra.mxu0 0.0
        %307 = vmatprep.subr.mxu0 0.0
        %308 = vmatpush1.msra.mxu0 0.0
        %309 = vmatprep.subr.mxu0 0.0
        %310 = vmatpush1.msra.mxu0 %v273
        %311 = vmatprep.subr.mxu0 0.0
        %312 = vmatpush1.msra.mxu0 %v272
        %313 = vmatprep.subr.mxu0 0.0
        %314 = vmatpush1.msra.mxu0 %v271
        %315 = vmatprep.subr.mxu0 0.0
        %316 = vmatpush1.msra.mxu0 %v270
        %317 = vmatprep.subr.mxu0 0.0
        %318 = vmatpush2.msra.mxu0 0.0
        %319 = vmatprep.subr.mxu0 0.0
        %320 = vmatpush2.msra.mxu0 0.0
        %321 = vmatprep.subr.mxu0 0.0
        %322 = vmatpush2.msra.mxu0 0.0
        %323 = vmatprep.subr.mxu0 0.0
        %324 = vmatpush2.msra.mxu0 0.0
        %325 = vmatprep.subr.mxu0 0.0
        %326 = vmatpush2.msra.mxu0 0.0
        %327 = vmatprep.subr.mxu0 0.0
        %328 = vmatpush2.msra.mxu0 0.0
        %329 = vmatprep.subr.mxu0 0.0
        %330 = vmatpush2.msra.mxu0 0.0
        %331 = vmatprep.subr.mxu0 0.0
        %332 = vmatpush2.msra.mxu0 0.0
        %333 = vmatprep.subr.mxu0 0.0
        %334 = vmatpush2.msra.mxu0 0.0
        %335 = vmatprep.subr.mxu0 0.0
        %336 = vmatpush2.msra.mxu0 0.0
        %337 = vmatprep.subr.mxu0 0.0
        %338 = vmatpush2.msra.mxu0 0.0
        %339 = vmatprep.subr.mxu0 0.0
        %340 = vmatpush2.msra.mxu0 0.0
        %341 = vmatprep.subr.mxu0 0.0
        %342 = vmatpush2.msra.mxu0 0.0
        %343 = vmatprep.subr.mxu0 0.0
        %344 = vmatpush2.msra.mxu0 0.0
        %345 = vmatprep.subr.mxu0 0.0
        %346 = vmatpush2.msra.mxu0 0.0
        %347 = vmatprep.subr.mxu0 0.0
        %348 = vmatpush2.msra.mxu0 0.0
        %349 = vmatprep.mubr.f32.mxu0 0.0
        %350 = vmatmul.mubr.f32.gmra.mxu0 %v283
        %v351 = vpop.f32.mrf.mxu0
        %v352 = vadd.f32 %v279, %v351
        %v353 = vpop.f32.mrf.mxu0
        %354 = vdwg.mxu0
        %v355 = vlaneseq
        %v356 = vshrl.u32 %v355, 7
        %v357 = vlaneseq
        %v358 = vand.u32 %v357, 127
        %vm359 = vcmp.ge.s32.totalorder %v356, %v358
        %vm360 = vcmask 64512
        %v362 = vsel %vm360, %v352, 0
        %v364 = vsel %vm360, %v269, 0
        %366 = vmatprep.subr.mxu0 0.0
        %367 = vmatpush1.xpose.msra.mxu0 0.0
        %368 = vmatprep.subr.mxu0 0.0
        %369 = vmatpush1.xpose.msra.mxu0 0.0
        %370 = vmatprep.subr.mxu0 0.0
        %371 = vmatpush1.xpose.msra.mxu0 0.0
        %372 = vmatprep.subr.mxu0 0.0
        %373 = vmatpush1.xpose.msra.mxu0 0.0
        %374 = vmatprep.subr.mxu0 0.0
        %375 = vmatpush1.xpose.msra.mxu0 0.0
        %376 = vmatprep.subr.mxu0 0.0
        %377 = vmatpush1.xpose.msra.mxu0 0.0
        %378 = vmatprep.subr.mxu0 0.0
        %379 = vmatpush1.xpose.msra.mxu0 0.0
        %380 = vmatprep.subr.mxu0 0.0
        %381 = vmatpush1.xpose.msra.mxu0 0.0
        %382 = vmatprep.subr.mxu0 0.0
        %383 = vmatpush1.xpose.msra.mxu0 0.0
        %384 = vmatprep.subr.mxu0 0.0
        %385 = vmatpush1.xpose.msra.mxu0 0.0
        %386 = vmatprep.subr.mxu0 0.0
        %387 = vmatpush1.xpose.msra.mxu0 0.0
        %388 = vmatprep.subr.mxu0 0.0
        %389 = vmatpush1.xpose.msra.mxu0 0.0
        %390 = vmatprep.subr.mxu0 0.0
        %391 = vmatpush1.xpose.msra.mxu0 0.0
        %392 = vmatprep.subr.mxu0 0.0
        %393 = vmatpush1.xpose.msra.mxu0 0.0
        %394 = vmatprep.subr.mxu0 0.0
        %395 = vmatpush1.xpose.msra.mxu0 0.0
        %396 = vmatprep.subr.mxu0 0.0
        %397 = vmatpush1.xpose.msra.mxu0 %v364
        %398 = vmatprep.subr.mxu0 0.0
        %399 = vmatpush2.xpose.msra.mxu0 0.0
        %400 = vmatprep.subr.mxu0 0.0
        %401 = vmatpush2.xpose.msra.mxu0 0.0
        %402 = vmatprep.subr.mxu0 0.0
        %403 = vmatpush2.xpose.msra.mxu0 0.0
        %404 = vmatprep.subr.mxu0 0.0
        %405 = vmatpush2.xpose.msra.mxu0 0.0
        %406 = vmatprep.subr.mxu0 0.0
        %407 = vmatpush2.xpose.msra.mxu0 0.0
        %408 = vmatprep.subr.mxu0 0.0
        %409 = vmatpush2.xpose.msra.mxu0 0.0
        %410 = vmatprep.subr.mxu0 0.0
        %411 = vmatpush2.xpose.msra.mxu0 0.0
        %412 = vmatprep.subr.mxu0 0.0
        %413 = vmatpush2.xpose.msra.mxu0 0.0
        %414 = vmatprep.subr.mxu0 0.0
        %415 = vmatpush2.xpose.msra.mxu0 0.0
        %416 = vmatprep.subr.mxu0 0.0
        %417 = vmatpush2.xpose.msra.mxu0 0.0
        %418 = vmatprep.subr.mxu0 0.0
        %419 = vmatpush2.xpose.msra.mxu0 0.0
        %420 = vmatprep.subr.mxu0 0.0
        %421 = vmatpush2.xpose.msra.mxu0 0.0
        %422 = vmatprep.subr.mxu0 0.0
        %423 = vmatpush2.xpose.msra.mxu0 0.0
        %424 = vmatprep.subr.mxu0 0.0
        %425 = vmatpush2.xpose.msra.mxu0 0.0
        %426 = vmatprep.subr.mxu0 0.0
        %427 = vmatpush2.xpose.msra.mxu0 0.0
        %428 = vmatprep.subr.mxu0 0.0
        %429 = vmatpush2.xpose.msra.mxu0 0.0
        %430 = vmatprep.mubr.f32.mxu0 0.0
        %431 = vmatmul.mubr.f32.gmra.mxu0 %v362
        %v432 = vpop.f32.mrf.mxu0
        %v433 = vadd.f32 0.0, %v432
        %v434 = vpop.f32.mrf.mxu0
        %435 = vdwg.mxu0
        %v436 = vsel %vm359, %v433, -inf
        %v437 = vsel %vm360, %v436, -inf
        %438 = vmax.xlane.f32.xlu0 %v437
        %v439 = vpop.xlane.xlu0 %438
        %v440 = vsub.f32 %v436, %v439
        %v441 = vmul.f32 %v440, 1.442695
        %v442 = vpow.pop %v441
        %v443 = vsel %vm360, %v442, 0.0
        %444 = vadd.xlane.f32.xlu0 %v443
        %v445 = vpop.xlane.xlu0 %444
        %v446 = vrcp.pop %v445
        %v447 = vmul.f32 %v442, %v446
        %448 = vrot.lane.b32.xlu0 %v352, 96
        %v449 = vpop.permute.xlu0 %448
        %v452 = vsel %vm360, %v447, 0
        %454 = vmatprep.subr.mxu0 0.0
        %455 = vmatpush1.msra.mxu0 0.0
        %456 = vmatprep.subr.mxu0 0.0
        %457 = vmatpush1.msra.mxu0 0.0
        %458 = vmatprep.subr.mxu0 0.0
        %459 = vmatpush1.msra.mxu0 0.0
        %460 = vmatprep.subr.mxu0 0.0
        %461 = vmatpush1.msra.mxu0 0.0
        %462 = vmatprep.subr.mxu0 0.0
        %463 = vmatpush1.msra.mxu0 0.0
        %464 = vmatprep.subr.mxu0 0.0
        %465 = vmatpush1.msra.mxu0 0.0
        %466 = vmatprep.subr.mxu0 0.0
        %467 = vmatpush1.msra.mxu0 0.0
        %468 = vmatprep.subr.mxu0 0.0
        %469 = vmatpush1.msra.mxu0 0.0
        %470 = vmatprep.subr.mxu0 0.0
        %471 = vmatpush1.msra.mxu0 0.0
        %472 = vmatprep.subr.mxu0 0.0
        %473 = vmatpush1.msra.mxu0 0.0
        %474 = vmatprep.subr.mxu0 0.0
        %475 = vmatpush1.msra.mxu0 0.0
        %476 = vmatprep.subr.mxu0 0.0
        %477 = vmatpush1.msra.mxu0 0.0
        %478 = vmatprep.subr.mxu0 0.0
        %479 = vmatpush1.msra.mxu0 0.0
        %480 = vmatprep.subr.mxu0 0.0
        %481 = vmatpush1.msra.mxu0 0.0
        %482 = vmatprep.subr.mxu0 0.0
        %483 = vmatpush1.msra.mxu0 0.0
        %484 = vmatprep.subr.mxu0 0.0
        %485 = vmatpush1.msra.mxu0 %v449
        %486 = vmatprep.subr.mxu0 0.0
        %487 = vmatpush2.msra.mxu0 0.0
        %488 = vmatprep.subr.mxu0 0.0
        %489 = vmatpush2.msra.mxu0 0.0
        %490 = vmatprep.subr.mxu0 0.0
        %491 = vmatpush2.msra.mxu0 0.0
        %492 = vmatprep.subr.mxu0 0.0
        %493 = vmatpush2.msra.mxu0 0.0
        %494 = vmatprep.subr.mxu0 0.0
        %495 = vmatpush2.msra.mxu0 0.0
        %496 = vmatprep.subr.mxu0 0.0
        %497 = vmatpush2.msra.mxu0 0.0
        %498 = vmatprep.subr.mxu0 0.0
        %499 = vmatpush2.msra.mxu0 0.0
        %500 = vmatprep.subr.mxu0 0.0
        %501 = vmatpush2.msra.mxu0 0.0
        %502 = vmatprep.subr.mxu0 0.0
        %503 = vmatpush2.msra.mxu0 0.0
        %504 = vmatprep.subr.mxu0 0.0
        %505 = vmatpush2.msra.mxu0 0.0
        %506 = vmatprep.subr.mxu0 0.0
        %507 = vmatpush2.msra.mxu0 0.0
        %508 = vmatprep.subr.mxu0 0.0
        %509 = vmatpush2.msra.mxu0 0.0
        %510 = vmatprep.subr.mxu0 0.0
        %511 = vmatpush2.msra.mxu0 0.0
        %512 = vmatprep.subr.mxu0 0.0
        %513 = vmatpush2.msra.mxu0 0.0
        %514 = vmatprep.subr.mxu0 0.0
        %515 = vmatpush2.msra.mxu0 0.0
        %516 = vmatprep.subr.mxu0 0.0
        %517 = vmatpush2.msra.mxu0 0.0
        %518 = vmatprep.mubr.f32.mxu0 0.0
        %519 = vmatmul.mubr.f32.gmra.mxu0 %v452
        %v520 = vpop.f32.mrf.mxu0
        %v521 = vadd.f32 0.0, %v520
        %v522 = vpop.f32.mrf.mxu0
        %523 = vdwg.mxu0
        %524 = vrot.lane.b32.xlu0 %v352, 120
        %v525 = vpop.permute.xlu0 %524
        %526 = vrot.lane.b32.xlu0 %v269, 120
        %v527 = vpop.permute.xlu0 %526
        %v528 = vsel %vm360, %v525, 0
        %v530 = vsel %vm360, %v527, 0
        %532 = vmatprep.subr.mxu0 0.0
        %533 = vmatpush1.xpose.msra.mxu0 0.0
        %534 = vmatprep.subr.mxu0 0.0
        %535 = vmatpush1.xpose.msra.mxu0 0.0
        %536 = vmatprep.subr.mxu0 0.0
        %537 = vmatpush1.xpose.msra.mxu0 0.0
        %538 = vmatprep.subr.mxu0 0.0
        %539 = vmatpush1.xpose.msra.mxu0 0.0
        %540 = vmatprep.subr.mxu0 0.0
        %541 = vmatpush1.xpose.msra.mxu0 0.0
        %542 = vmatprep.subr.mxu0 0.0
        %543 = vmatpush1.xpose.msra.mxu0 0.0
        %544 = vmatprep.subr.mxu0 0.0
        %545 = vmatpush1.xpose.msra.mxu0 0.0
        %546 = vmatprep.subr.mxu0 0.0
        %547 = vmatpush1.xpose.msra.mxu0 0.0
        %548 = vmatprep.subr.mxu0 0.0
        %549 = vmatpush1.xpose.msra.mxu0 0.0
        %550 = vmatprep.subr.mxu0 0.0
        %551 = vmatpush1.xpose.msra.mxu0 0.0
        %552 = vmatprep.subr.mxu0 0.0
        %553 = vmatpush1.xpose.msra.mxu0 0.0
        %554 = vmatprep.subr.mxu0 0.0
        %555 = vmatpush1.xpose.msra.mxu0 0.0
        %556 = vmatprep.subr.mxu0 0.0
        %557 = vmatpush1.xpose.msra.mxu0 0.0
        %558 = vmatprep.subr.mxu0 0.0
        %559 = vmatpush1.xpose.msra.mxu0 0.0
        %560 = vmatprep.subr.mxu0 0.0
        %561 = vmatpush1.xpose.msra.mxu0 0.0
        %562 = vmatprep.subr.mxu0 0.0
        %563 = vmatpush1.xpose.msra.mxu0 %v530
        %564 = vmatprep.subr.mxu0 0.0
        %565 = vmatpush2.xpose.msra.mxu0 0.0
        %566 = vmatprep.subr.mxu0 0.0
        %567 = vmatpush2.xpose.msra.mxu0 0.0
        %568 = vmatprep.subr.mxu0 0.0
        %569 = vmatpush2.xpose.msra.mxu0 0.0
        %570 = vmatprep.subr.mxu0 0.0
        %571 = vmatpush2.xpose.msra.mxu0 0.0
        %572 = vmatprep.subr.mxu0 0.0
        %573 = vmatpush2.xpose.msra.mxu0 0.0
        %574 = vmatprep.subr.mxu0 0.0
        %575 = vmatpush2.xpose.msra.mxu0 0.0
        %576 = vmatprep.subr.mxu0 0.0
        %577 = vmatpush2.xpose.msra.mxu0 0.0
        %578 = vmatprep.subr.mxu0 0.0
        %579 = vmatpush2.xpose.msra.mxu0 0.0
        %580 = vmatprep.subr.mxu0 0.0
        %581 = vmatpush2.xpose.msra.mxu0 0.0
        %582 = vmatprep.subr.mxu0 0.0
        %583 = vmatpush2.xpose.msra.mxu0 0.0
        %584 = vmatprep.subr.mxu0 0.0
        %585 = vmatpush2.xpose.msra.mxu0 0.0
        %586 = vmatprep.subr.mxu0 0.0
        %587 = vmatpush2.xpose.msra.mxu0 0.0
        %588 = vmatprep.subr.mxu0 0.0
        %589 = vmatpush2.xpose.msra.mxu0 0.0
        %590 = vmatprep.subr.mxu0 0.0
        %591 = vmatpush2.xpose.msra.mxu0 0.0
        %592 = vmatprep.subr.mxu0 0.0
        %593 = vmatpush2.xpose.msra.mxu0 0.0
        %594 = vmatprep.subr.mxu0 0.0
        %595 = vmatpush2.xpose.msra.mxu0 0.0
        %596 = vmatprep.mubr.f32.mxu0 0.0
        %597 = vmatmul.mubr.f32.gmra.mxu0 %v528
        %v598 = vpop.f32.mrf.mxu0
        %v599 = vadd.f32 0.0, %v598
        %v600 = vpop.f32.mrf.mxu0
        %601 = vdwg.mxu0
        %v602 = vsel %vm359, %v599, -inf
        %v603 = vsel %vm360, %v602, -inf
        %604 = vmax.xlane.f32.xlu0 %v603
        %v605 = vpop.xlane.xlu0 %604
        %v606 = vsub.f32 %v602, %v605
        %v607 = vmul.f32 %v606, 1.442695
        %v608 = vpow.pop %v607
        %v609 = vsel %vm360, %v608, 0.0
        %610 = vadd.xlane.f32.xlu0 %v609
        %v611 = vpop.xlane.xlu0 %610
        %v612 = vrcp.pop %v611
        %v613 = vmul.f32 %v608, %v612
        %614 = vrot.lane.b32.xlu0 %v352, 88
        %v615 = vpop.permute.xlu0 %614
        %v618 = vsel %vm360, %v613, 0
        %620 = vmatprep.subr.mxu0 0.0
        %621 = vmatpush1.msra.mxu0 0.0
        %622 = vmatprep.subr.mxu0 0.0
        %623 = vmatpush1.msra.mxu0 0.0
        %624 = vmatprep.subr.mxu0 0.0
        %625 = vmatpush1.msra.mxu0 0.0
        %626 = vmatprep.subr.mxu0 0.0
        %627 = vmatpush1.msra.mxu0 0.0
        %628 = vmatprep.subr.mxu0 0.0
        %629 = vmatpush1.msra.mxu0 0.0
        %630 = vmatprep.subr.mxu0 0.0
        %631 = vmatpush1.msra.mxu0 0.0
        %632 = vmatprep.subr.mxu0 0.0
        %633 = vmatpush1.msra.mxu0 0.0
        %634 = vmatprep.subr.mxu0 0.0
        %635 = vmatpush1.msra.mxu0 0.0
        %636 = vmatprep.subr.mxu0 0.0
        %637 = vmatpush1.msra.mxu0 0.0
        %638 = vmatprep.subr.mxu0 0.0
        %639 = vmatpush1.msra.mxu0 0.0
        %640 = vmatprep.subr.mxu0 0.0
        %641 = vmatpush1.msra.mxu0 0.0
        %642 = vmatprep.subr.mxu0 0.0
        %643 = vmatpush1.msra.mxu0 0.0
        %644 = vmatprep.subr.mxu0 0.0
        %645 = vmatpush1.msra.mxu0 0.0
        %646 = vmatprep.subr.mxu0 0.0
        %647 = vmatpush1.msra.mxu0 0.0
        %648 = vmatprep.subr.mxu0 0.0
        %649 = vmatpush1.msra.mxu0 0.0
        %650 = vmatprep.subr.mxu0 0.0
        %651 = vmatpush1.msra.mxu0 %v615
        %652 = vmatprep.subr.mxu0 0.0
        %653 = vmatpush2.msra.mxu0 0.0
        %654 = vmatprep.subr.mxu0 0.0
        %655 = vmatpush2.msra.mxu0 0.0
        %656 = vmatprep.subr.mxu0 0.0
        %657 = vmatpush2.msra.mxu0 0.0
        %658 = vmatprep.subr.mxu0 0.0
        %659 = vmatpush2.msra.mxu0 0.0
        %660 = vmatprep.subr.mxu0 0.0
        %661 = vmatpush2.msra.mxu0 0.0
        %662 = vmatprep.subr.mxu0 0.0
        %663 = vmatpush2.msra.mxu0 0.0
        %664 = vmatprep.subr.mxu0 0.0
        %665 = vmatpush2.msra.mxu0 0.0
        %666 = vmatprep.subr.mxu0 0.0
        %667 = vmatpush2.msra.mxu0 0.0
        %668 = vmatprep.subr.mxu0 0.0
        %669 = vmatpush2.msra.mxu0 0.0
        %670 = vmatprep.subr.mxu0 0.0
        %671 = vmatpush2.msra.mxu0 0.0
        %672 = vmatprep.subr.mxu0 0.0
        %673 = vmatpush2.msra.mxu0 0.0
        %674 = vmatprep.subr.mxu0 0.0
        %675 = vmatpush2.msra.mxu0 0.0
        %676 = vmatprep.subr.mxu0 0.0
        %677 = vmatpush2.msra.mxu0 0.0
        %678 = vmatprep.subr.mxu0 0.0
        %679 = vmatpush2.msra.mxu0 0.0
        %680 = vmatprep.subr.mxu0 0.0
        %681 = vmatpush2.msra.mxu0 0.0
        %682 = vmatprep.subr.mxu0 0.0
        %683 = vmatpush2.msra.mxu0 0.0
        %684 = vmatprep.mubr.f32.mxu0 0.0
        %685 = vmatmul.mubr.f32.gmra.mxu0 %v618
        %v686 = vpop.f32.mrf.mxu0
        %v687 = vadd.f32 0.0, %v686
        %v688 = vpop.f32.mrf.mxu0
        %689 = vdwg.mxu0
        %690 = vrot.lane.b32.xlu0 %v352, 112
        %v691 = vpop.permute.xlu0 %690
        %692 = vrot.lane.b32.xlu0 %v269, 112
        %v693 = vpop.permute.xlu0 %692
        %v694 = vsel %vm360, %v691, 0
        %v696 = vsel %vm360, %v693, 0
        %698 = vmatprep.subr.mxu0 0.0
        %699 = vmatpush1.xpose.msra.mxu0 0.0
        %700 = vmatprep.subr.mxu0 0.0
        %701 = vmatpush1.xpose.msra.mxu0 0.0
        %702 = vmatprep.subr.mxu0 0.0
        %703 = vmatpush1.xpose.msra.mxu0 0.0
        %704 = vmatprep.subr.mxu0 0.0
        %705 = vmatpush1.xpose.msra.mxu0 0.0
        %706 = vmatprep.subr.mxu0 0.0
        %707 = vmatpush1.xpose.msra.mxu0 0.0
        %708 = vmatprep.subr.mxu0 0.0
        %709 = vmatpush1.xpose.msra.mxu0 0.0
        %710 = vmatprep.subr.mxu0 0.0
        %711 = vmatpush1.xpose.msra.mxu0 0.0
        %712 = vmatprep.subr.mxu0 0.0
        %713 = vmatpush1.xpose.msra.mxu0 0.0
        %714 = vmatprep.subr.mxu0 0.0
        %715 = vmatpush1.xpose.msra.mxu0 0.0
        %716 = vmatprep.subr.mxu0 0.0
        %717 = vmatpush1.xpose.msra.mxu0 0.0
        %718 = vmatprep.subr.mxu0 0.0
        %719 = vmatpush1.xpose.msra.mxu0 0.0
        %720 = vmatprep.subr.mxu0 0.0
        %721 = vmatpush1.xpose.msra.mxu0 0.0
        %722 = vmatprep.subr.mxu0 0.0
        %723 = vmatpush1.xpose.msra.mxu0 0.0
        %724 = vmatprep.subr.mxu0 0.0
        %725 = vmatpush1.xpose.msra.mxu0 0.0
        %726 = vmatprep.subr.mxu0 0.0
        %727 = vmatpush1.xpose.msra.mxu0 0.0
        %728 = vmatprep.subr.mxu0 0.0
        %729 = vmatpush1.xpose.msra.mxu0 %v696
        %730 = vmatprep.subr.mxu0 0.0
        %731 = vmatpush2.xpose.msra.mxu0 0.0
        %732 = vmatprep.subr.mxu0 0.0
        %733 = vmatpush2.xpose.msra.mxu0 0.0
        %734 = vmatprep.subr.mxu0 0.0
        %735 = vmatpush2.xpose.msra.mxu0 0.0
        %736 = vmatprep.subr.mxu0 0.0
        %737 = vmatpush2.xpose.msra.mxu0 0.0
        %738 = vmatprep.subr.mxu0 0.0
        %739 = vmatpush2.xpose.msra.mxu0 0.0
        %740 = vmatprep.subr.mxu0 0.0
        %741 = vmatpush2.xpose.msra.mxu0 0.0
        %742 = vmatprep.subr.mxu0 0.0
        %743 = vmatpush2.xpose.msra.mxu0 0.0
        %744 = vmatprep.subr.mxu0 0.0
        %745 = vmatpush2.xpose.msra.mxu0 0.0
        %746 = vmatprep.subr.mxu0 0.0
        %747 = vmatpush2.xpose.msra.mxu0 0.0
        %748 = vmatprep.subr.mxu0 0.0
        %749 = vmatpush2.xpose.msra.mxu0 0.0
        %750 = vmatprep.subr.mxu0 0.0
        %751 = vmatpush2.xpose.msra.mxu0 0.0
        %752 = vmatprep.subr.mxu0 0.0
        %753 = vmatpush2.xpose.msra.mxu0 0.0
        %754 = vmatprep.subr.mxu0 0.0
        %755 = vmatpush2.xpose.msra.mxu0 0.0
        %756 = vmatprep.subr.mxu0 0.0
        %757 = vmatpush2.xpose.msra.mxu0 0.0
        %758 = vmatprep.subr.mxu0 0.0
        %759 = vmatpush2.xpose.msra.mxu0 0.0
        %760 = vmatprep.subr.mxu0 0.0
        %761 = vmatpush2.xpose.msra.mxu0 0.0
        %762 = vmatprep.mubr.f32.mxu0 0.0
        %763 = vmatmul.mubr.f32.gmra.mxu0 %v694
        %v764 = vpop.f32.mrf.mxu0
        %v765 = vadd.f32 0.0, %v764
        %v766 = vpop.f32.mrf.mxu0
        %767 = vdwg.mxu0
        %v768 = vsel %vm359, %v765, -inf
        %v769 = vsel %vm360, %v768, -inf
        %770 = vmax.xlane.f32.xlu0 %v769
        %v771 = vpop.xlane.xlu0 %770
        %v772 = vsub.f32 %v768, %v771
        %v773 = vmul.f32 %v772, 1.442695
        %v774 = vpow.pop %v773
        %v775 = vsel %vm360, %v774, 0.0
        %776 = vadd.xlane.f32.xlu0 %v775
        %v777 = vpop.xlane.xlu0 %776
        %v778 = vrcp.pop %v777
        %v779 = vmul.f32 %v774, %v778
        %780 = vrot.lane.b32.xlu0 %v352, 80
        %v781 = vpop.permute.xlu0 %780
        %v784 = vsel %vm360, %v779, 0
        %786 = vmatprep.subr.mxu0 0.0
        %787 = vmatpush1.msra.mxu0 0.0
        %788 = vmatprep.subr.mxu0 0.0
        %789 = vmatpush1.msra.mxu0 0.0
        %790 = vmatprep.subr.mxu0 0.0
        %791 = vmatpush1.msra.mxu0 0.0
        %792 = vmatprep.subr.mxu0 0.0
        %793 = vmatpush1.msra.mxu0 0.0
        %794 = vmatprep.subr.mxu0 0.0
        %795 = vmatpush1.msra.mxu0 0.0
        %796 = vmatprep.subr.mxu0 0.0
        %797 = vmatpush1.msra.mxu0 0.0
        %798 = vmatprep.subr.mxu0 0.0
        %799 = vmatpush1.msra.mxu0 0.0
        %800 = vmatprep.subr.mxu0 0.0
        %801 = vmatpush1.msra.mxu0 0.0
        %802 = vmatprep.subr.mxu0 0.0
        %803 = vmatpush1.msra.mxu0 0.0
        %804 = vmatprep.subr.mxu0 0.0
        %805 = vmatpush1.msra.mxu0 0.0
        %806 = vmatprep.subr.mxu0 0.0
        %807 = vmatpush1.msra.mxu0 0.0
        %808 = vmatprep.subr.mxu0 0.0
        %809 = vmatpush1.msra.mxu0 0.0
        %810 = vmatprep.subr.mxu0 0.0
        %811 = vmatpush1.msra.mxu0 0.0
        %812 = vmatprep.subr.mxu0 0.0
        %813 = vmatpush1.msra.mxu0 0.0
        %814 = vmatprep.subr.mxu0 0.0
        %815 = vmatpush1.msra.mxu0 0.0
        %816 = vmatprep.subr.mxu0 0.0
        %817 = vmatpush1.msra.mxu0 %v781
        %818 = vmatprep.subr.mxu0 0.0
        %819 = vmatpush2.msra.mxu0 0.0
        %820 = vmatprep.subr.mxu0 0.0
        %821 = vmatpush2.msra.mxu0 0.0
        %822 = vmatprep.subr.mxu0 0.0
        %823 = vmatpush2.msra.mxu0 0.0
        %824 = vmatprep.subr.mxu0 0.0
        %825 = vmatpush2.msra.mxu0 0.0
        %826 = vmatprep.subr.mxu0 0.0
        %827 = vmatpush2.msra.mxu0 0.0
        %828 = vmatprep.subr.mxu0 0.0
        %829 = vmatpush2.msra.mxu0 0.0
        %830 = vmatprep.subr.mxu0 0.0
        %831 = vmatpush2.msra.mxu0 0.0
        %832 = vmatprep.subr.mxu0 0.0
        %833 = vmatpush2.msra.mxu0 0.0
        %834 = vmatprep.subr.mxu0 0.0
        %835 = vmatpush2.msra.mxu0 0.0
        %836 = vmatprep.subr.mxu0 0.0
        %837 = vmatpush2.msra.mxu0 0.0
        %838 = vmatprep.subr.mxu0 0.0
        %839 = vmatpush2.msra.mxu0 0.0
        %840 = vmatprep.subr.mxu0 0.0
        %841 = vmatpush2.msra.mxu0 0.0
        %842 = vmatprep.subr.mxu0 0.0
        %843 = vmatpush2.msra.mxu0 0.0
        %844 = vmatprep.subr.mxu0 0.0
        %845 = vmatpush2.msra.mxu0 0.0
        %846 = vmatprep.subr.mxu0 0.0
        %847 = vmatpush2.msra.mxu0 0.0
        %848 = vmatprep.subr.mxu0 0.0
        %849 = vmatpush2.msra.mxu0 0.0
        %850 = vmatprep.mubr.f32.mxu0 0.0
        %851 = vmatmul.mubr.f32.gmra.mxu0 %v784
        %v852 = vpop.f32.mrf.mxu0
        %v853 = vadd.f32 0.0, %v852
        %v854 = vpop.f32.mrf.mxu0
        %855 = vdwg.mxu0
        %856 = vrot.lane.b32.xlu0 %v352, 104
        %v857 = vpop.permute.xlu0 %856
        %858 = vrot.lane.b32.xlu0 %v269, 104
        %v859 = vpop.permute.xlu0 %858
        %v860 = vsel %vm360, %v857, 0
        %v862 = vsel %vm360, %v859, 0
        %864 = vmatprep.subr.mxu0 0.0
        %865 = vmatpush1.xpose.msra.mxu0 0.0
        %866 = vmatprep.subr.mxu0 0.0
        %867 = vmatpush1.xpose.msra.mxu0 0.0
        %868 = vmatprep.subr.mxu0 0.0
        %869 = vmatpush1.xpose.msra.mxu0 0.0
        %870 = vmatprep.subr.mxu0 0.0
        %871 = vmatpush1.xpose.msra.mxu0 0.0
        %872 = vmatprep.subr.mxu0 0.0
        %873 = vmatpush1.xpose.msra.mxu0 0.0
        %874 = vmatprep.subr.mxu0 0.0
        %875 = vmatpush1.xpose.msra.mxu0 0.0
        %876 = vmatprep.subr.mxu0 0.0
        %877 = vmatpush1.xpose.msra.mxu0 0.0
        %878 = vmatprep.subr.mxu0 0.0
        %879 = vmatpush1.xpose.msra.mxu0 0.0
        %880 = vmatprep.subr.mxu0 0.0
        %881 = vmatpush1.xpose.msra.mxu0 0.0
        %882 = vmatprep.subr.mxu0 0.0
        %883 = vmatpush1.xpose.msra.mxu0 0.0
        %884 = vmatprep.subr.mxu0 0.0
        %885 = vmatpush1.xpose.msra.mxu0 0.0
        %886 = vmatprep.subr.mxu0 0.0
        %887 = vmatpush1.xpose.msra.mxu0 0.0
        %888 = vmatprep.subr.mxu0 0.0
        %889 = vmatpush1.xpose.msra.mxu0 0.0
        %890 = vmatprep.subr.mxu0 0.0
        %891 = vmatpush1.xpose.msra.mxu0 0.0
        %892 = vmatprep.subr.mxu0 0.0
        %893 = vmatpush1.xpose.msra.mxu0 0.0
        %894 = vmatprep.subr.mxu0 0.0
        %895 = vmatpush1.xpose.msra.mxu0 %v862
        %896 = vmatprep.subr.mxu0 0.0
        %897 = vmatpush2.xpose.msra.mxu0 0.0
        %898 = vmatprep.subr.mxu0 0.0
        %899 = vmatpush2.xpose.msra.mxu0 0.0
        %900 = vmatprep.subr.mxu0 0.0
        %901 = vmatpush2.xpose.msra.mxu0 0.0
        %902 = vmatprep.subr.mxu0 0.0
        %903 = vmatpush2.xpose.msra.mxu0 0.0
        %904 = vmatprep.subr.mxu0 0.0
        %905 = vmatpush2.xpose.msra.mxu0 0.0
        %906 = vmatprep.subr.mxu0 0.0
        %907 = vmatpush2.xpose.msra.mxu0 0.0
        %908 = vmatprep.subr.mxu0 0.0
        %909 = vmatpush2.xpose.msra.mxu0 0.0
        %910 = vmatprep.subr.mxu0 0.0
        %911 = vmatpush2.xpose.msra.mxu0 0.0
        %912 = vmatprep.subr.mxu0 0.0
        %913 = vmatpush2.xpose.msra.mxu0 0.0
        %914 = vmatprep.subr.mxu0 0.0
        %915 = vmatpush2.xpose.msra.mxu0 0.0
        %916 = vmatprep.subr.mxu0 0.0
        %917 = vmatpush2.xpose.msra.mxu0 0.0
        %918 = vmatprep.subr.mxu0 0.0
        %919 = vmatpush2.xpose.msra.mxu0 0.0
        %920 = vmatprep.subr.mxu0 0.0
        %921 = vmatpush2.xpose.msra.mxu0 0.0
        %922 = vmatprep.subr.mxu0 0.0
        %923 = vmatpush2.xpose.msra.mxu0 0.0
        %924 = vmatprep.subr.mxu0 0.0
        %925 = vmatpush2.xpose.msra.mxu0 0.0
        %926 = vmatprep.subr.mxu0 0.0
        %927 = vmatpush2.xpose.msra.mxu0 0.0
        %928 = vmatprep.mubr.f32.mxu0 0.0
        %929 = vmatmul.mubr.f32.gmra.mxu0 %v860
        %v930 = vpop.f32.mrf.mxu0
        %v931 = vadd.f32 0.0, %v930
        %v932 = vpop.f32.mrf.mxu0
        %933 = vdwg.mxu0
        %v934 = vsel %vm359, %v931, -inf
        %v935 = vsel %vm360, %v934, -inf
        %936 = vmax.xlane.f32.xlu0 %v935
        %v937 = vpop.xlane.xlu0 %936
        %v938 = vsub.f32 %v934, %v937
        %v939 = vmul.f32 %v938, 1.442695
        %v940 = vpow.pop %v939
        %v941 = vsel %vm360, %v940, 0.0
        %942 = vadd.xlane.f32.xlu0 %v941
        %v943 = vpop.xlane.xlu0 %942
        %v944 = vrcp.pop %v943
        %v945 = vmul.f32 %v940, %v944
        %946 = vrot.lane.b32.xlu0 %v352, 72
        %v947 = vpop.permute.xlu0 %946
        %v950 = vsel %vm360, %v945, 0
        %952 = vmatprep.subr.mxu0 0.0
        %953 = vmatpush1.msra.mxu0 0.0
        %954 = vmatprep.subr.mxu0 0.0
        %955 = vmatpush1.msra.mxu0 0.0
        %956 = vmatprep.subr.mxu0 0.0
        %957 = vmatpush1.msra.mxu0 0.0
        %958 = vmatprep.subr.mxu0 0.0
        %959 = vmatpush1.msra.mxu0 0.0
        %960 = vmatprep.subr.mxu0 0.0
        %961 = vmatpush1.msra.mxu0 0.0
        %962 = vmatprep.subr.mxu0 0.0
        %963 = vmatpush1.msra.mxu0 0.0
        %964 = vmatprep.subr.mxu0 0.0
        %965 = vmatpush1.msra.mxu0 0.0
        %966 = vmatprep.subr.mxu0 0.0
        %967 = vmatpush1.msra.mxu0 0.0
        %968 = vmatprep.subr.mxu0 0.0
        %969 = vmatpush1.msra.mxu0 0.0
        %970 = vmatprep.subr.mxu0 0.0
        %971 = vmatpush1.msra.mxu0 0.0
        %972 = vmatprep.subr.mxu0 0.0
        %973 = vmatpush1.msra.mxu0 0.0
        %974 = vmatprep.subr.mxu0 0.0
        %975 = vmatpush1.msra.mxu0 0.0
        %976 = vmatprep.subr.mxu0 0.0
        %977 = vmatpush1.msra.mxu0 0.0
        %978 = vmatprep.subr.mxu0 0.0
        %979 = vmatpush1.msra.mxu0 0.0
        %980 = vmatprep.subr.mxu0 0.0
        %981 = vmatpush1.msra.mxu0 0.0
        %982 = vmatprep.subr.mxu0 0.0
        %983 = vmatpush1.msra.mxu0 %v947
        %984 = vmatprep.subr.mxu0 0.0
        %985 = vmatpush2.msra.mxu0 0.0
        %986 = vmatprep.subr.mxu0 0.0
        %987 = vmatpush2.msra.mxu0 0.0
        %988 = vmatprep.subr.mxu0 0.0
        %989 = vmatpush2.msra.mxu0 0.0
        %990 = vmatprep.subr.mxu0 0.0
        %991 = vmatpush2.msra.mxu0 0.0
        %992 = vmatprep.subr.mxu0 0.0
        %993 = vmatpush2.msra.mxu0 0.0
        %994 = vmatprep.subr.mxu0 0.0
        %995 = vmatpush2.msra.mxu0 0.0
        %996 = vmatprep.subr.mxu0 0.0
        %997 = vmatpush2.msra.mxu0 0.0
        %998 = vmatprep.subr.mxu0 0.0
        %999 = vmatpush2.msra.mxu0 0.0
        %1000 = vmatprep.subr.mxu0 0.0
        %1001 = vmatpush2.msra.mxu0 0.0
        %1002 = vmatprep.subr.mxu0 0.0
        %1003 = vmatpush2.msra.mxu0 0.0
        %1004 = vmatprep.subr.mxu0 0.0
        %1005 = vmatpush2.msra.mxu0 0.0
        %1006 = vmatprep.subr.mxu0 0.0
        %1007 = vmatpush2.msra.mxu0 0.0
        %1008 = vmatprep.subr.mxu0 0.0
        %1009 = vmatpush2.msra.mxu0 0.0
        %1010 = vmatprep.subr.mxu0 0.0
        %1011 = vmatpush2.msra.mxu0 0.0
        %1012 = vmatprep.subr.mxu0 0.0
        %1013 = vmatpush2.msra.mxu0 0.0
        %1014 = vmatprep.subr.mxu0 0.0
        %1015 = vmatpush2.msra.mxu0 0.0
        %1016 = vmatprep.mubr.f32.mxu0 0.0
        %1017 = vmatmul.mubr.f32.gmra.mxu0 %v950
        %v1018 = vpop.f32.mrf.mxu0
        %v1019 = vadd.f32 0.0, %v1018
        %v1020 = vpop.f32.mrf.mxu0
        %1021 = vdwg.mxu0
        %1023 = vrot.lane.b32.xlu0 %v687, 8
        %v1024 = vpop.permute.xlu0 %1023
        %1027 = vrot.lane.b32.xlu0 %v853, 16
        %v1028 = vpop.permute.xlu0 %1027
        %1031 = vrot.lane.b32.xlu0 %v1019, 24
        %v1032 = vpop.permute.xlu0 %1031
        %v1034 = vsel %vm360, %v521, %v1024
        %vm1035 = vcmask 130048
        %v1036 = vsel %vm1035, %v1034, %v1028
        %vm1037 = vcmask 195584
        %v1038 = vsel %vm1037, %v1036, %v1032
        %v1039 = vld [vmem:[#allocation7] sm:$0xff]
        %v1040 = vld [vmem:[#allocation7 + $0x8] sm:$0xff]
        %v1041 = vld [vmem:[#allocation7 + $0x10] sm:$0xff]
        %v1042 = vld [vmem:[#allocation7 + $0x18] sm:$0xff]
        %v1043 = vld [vmem:[%s4] sm:$0x1]
        %v1045 = vlaneseq
        %v1046 = vshrl.u32 %v1045, 7
        %v1047 = vsub.s32 0, %v1046
        %v1048 = vrot.slane %v1043, %v1047
        %v1051 = vsel %vm281, %v1038, 0
        %1053 = vmatprep.subr.mxu0 0.0
        %1054 = vmatpush1.msra.mxu0 0.0
        %1055 = vmatprep.subr.mxu0 0.0
        %1056 = vmatpush1.msra.mxu0 0.0
        %1057 = vmatprep.subr.mxu0 0.0
        %1058 = vmatpush1.msra.mxu0 0.0
        %1059 = vmatprep.subr.mxu0 0.0
        %1060 = vmatpush1.msra.mxu0 0.0
        %1061 = vmatprep.subr.mxu0 0.0
        %1062 = vmatpush1.msra.mxu0 0.0
        %1063 = vmatprep.subr.mxu0 0.0
        %1064 = vmatpush1.msra.mxu0 0.0
        %1065 = vmatprep.subr.mxu0 0.0
        %1066 = vmatpush1.msra.mxu0 0.0
        %1067 = vmatprep.subr.mxu0 0.0
        %1068 = vmatpush1.msra.mxu0 0.0
        %1069 = vmatprep.subr.mxu0 0.0
        %1070 = vmatpush1.msra.mxu0 0.0
        %1071 = vmatprep.subr.mxu0 0.0
        %1072 = vmatpush1.msra.mxu0 0.0
        %1073 = vmatprep.subr.mxu0 0.0
        %1074 = vmatpush1.msra.mxu0 0.0
        %1075 = vmatprep.subr.mxu0 0.0
        %1076 = vmatpush1.msra.mxu0 0.0
        %1077 = vmatprep.subr.mxu0 0.0
        %1078 = vmatpush1.msra.mxu0 %v1042
        %1079 = vmatprep.subr.mxu0 0.0
        %1080 = vmatpush1.msra.mxu0 %v1041
        %1081 = vmatprep.subr.mxu0 0.0
        %1082 = vmatpush1.msra.mxu0 %v1040
        %1083 = vmatprep.subr.mxu0 0.0
        %1084 = vmatpush1.msra.mxu0 %v1039
        %1085 = vmatprep.subr.mxu0 0.0
        %1086 = vmatpush2.msra.mxu0 0.0
        %1087 = vmatprep.subr.mxu0 0.0
        %1088 = vmatpush2.msra.mxu0 0.0
        %1089 = vmatprep.subr.mxu0 0.0
        %1090 = vmatpush2.msra.mxu0 0.0
        %1091 = vmatprep.subr.mxu0 0.0
        %1092 = vmatpush2.msra.mxu0 0.0
        %1093 = vmatprep.subr.mxu0 0.0
        %1094 = vmatpush2.msra.mxu0 0.0
        %1095 = vmatprep.subr.mxu0 0.0
        %1096 = vmatpush2.msra.mxu0 0.0
        %1097 = vmatprep.subr.mxu0 0.0
        %1098 = vmatpush2.msra.mxu0 0.0
        %1099 = vmatprep.subr.mxu0 0.0
        %1100 = vmatpush2.msra.mxu0 0.0
        %1101 = vmatprep.subr.mxu0 0.0
        %1102 = vmatpush2.msra.mxu0 0.0
        %1103 = vmatprep.subr.mxu0 0.0
        %1104 = vmatpush2.msra.mxu0 0.0
        %1105 = vmatprep.subr.mxu0 0.0
        %1106 = vmatpush2.msra.mxu0 0.0
        %1107 = vmatprep.subr.mxu0 0.0
        %1108 = vmatpush2.msra.mxu0 0.0
        %1109 = vmatprep.subr.mxu0 0.0
        %1110 = vmatpush2.msra.mxu0 0.0
        %1111 = vmatprep.subr.mxu0 0.0
        %1112 = vmatpush2.msra.mxu0 0.0
        %1113 = vmatprep.subr.mxu0 0.0
        %1114 = vmatpush2.msra.mxu0 0.0
        %1115 = vmatprep.subr.mxu0 0.0
        %1116 = vmatpush2.msra.mxu0 0.0
        %1117 = vmatprep.mubr.f32.mxu0 0.0
        %1118 = vmatmul.mubr.f32.gmra.mxu0 %v1051
        %v1119 = vpop.f32.mrf.mxu0
        %v1120 = vadd.f32 %v1048, %v1119
        %v1121 = vpop.f32.mrf.mxu0
        %1122 = vdwg.mxu0
        %1123 = vst.msk [vmem:[%s268] sm:$0xff] %vm281, %v1120
        %s1124 = sand.u32 %s141, 1
        %s1125 = scalar_lea.sflag [#allocation4], %s1124
        %s1126 = sand.u32 %s141, 1
        %s1127 = smul.addr %s1126, 8
        %s1128 = scalar_lea.vmem [#allocation8], %s1127
        // Predicated region
        $region53: #{tpu_custom_call.1} parent=39 // pred_check
          %p1129 = pneg %p151
        $region54: #{tpu_custom_call.1} parent=39 // pred_check_branch
          %1131 = sbr.rel (%p1129) target = $region56
        $region55: #{tpu_custom_call.1} parent=39 // pred_region
          %s1133 = ssub.s32 128, 128
          %1134 = vsyncadd %s1125, %s1133
          %s1135 = smul.addr %s23, 128
          %s1136 = scalar_lea.hbm %s5, %s1135
          %s1138 = sshll.u32 %s1128, 4
          %s1139 = int_to_ptr.vmem [resolvable:$true] %s1138
          %1141 = dma.vmem_to_hbm [thread:$0]  %s1139, 128, %s1136, %s1125
        $region56: #{tpu_custom_call.1} parent=39 // pred_fallthru
          _
      $region40: #{tpu_custom_call.1} parent=5 // pred_fallthru
        _
      %p1142 = scmp.le.s32.totalorder 2, %s18
      // Predicated region
      $region57: #{tpu_custom_call.1} parent=5 // pred_check
        %p1143 = pneg %p1142
      $region58: #{tpu_custom_call.1} parent=5 // pred_check_branch
        %1145 = sbr.rel (%p1143) target = $region60
      $region59: #{tpu_custom_call.1} parent=5 // pred_region
        %s1146 = ssub.s32 %s18, 2
        // Predicated region
        $region61: #{tpu_custom_call.1} parent=59 // pred_check
          %p1147 = pneg %p157
        $region62: #{tpu_custom_call.1} parent=59 // pred_check_branch
          %1149 = sbr.rel (%p1147) target = $region64
        $region63: #{tpu_custom_call.1} parent=59 // pred_region
          %s1150 = sand.u32 %s142, 1
          %s1151 = scalar_lea.sflag [#allocation4], %s1150
          %s1152 = sand.u32 %s142, 1
          %s1153 = smul.addr %s1152, 8
          %s1154 = scalar_lea.vmem [#allocation8], %s1153
          %1155 = dma.done %s1151, 128
        $region64: #{tpu_custom_call.1} parent=59 // pred_fallthru
          _
      $region60: #{tpu_custom_call.1} parent=5 // pred_fallthru
        _
    $region6: #{tpu_custom_call.1} parent=1 // loop_footer
      %s22 = sadd.s32 1, %s18
    $region7: #{tpu_custom_call.1} parent=1 // loop_footer_branch
      %17 = sbr.rel target = $region3
    $region8: #{tpu_custom_call.1} parent=1 // loop_exit
      _
    %1156 = vsyncpa [#allocation3], 1
    %s1157 = scalar_lea.sflag [#allocation3], 1
    %1158 = vsyncpa %s1157, 1
    %1159 = vsyncpa [#allocation6], 1
    %1160 = vsyncpa [#allocation4], 1
    %s1161 = scalar_lea.sflag [#allocation4], 1
    %1162 = vsyncpa %s1161, 1

</llo_original>
